<compile_context>
chip_gen: v7x
topology: tpu7x:2x2x1
jax: 0.10.0
libtpu: 0.0.40
codegen_flags: <defaults>
</compile_context>

<pallas_src>
import jax
import jax.numpy as jnp
from jax.experimental import pallas as pl
from jax.experimental.pallas import tpu as pltpu


def _round_up(n, m):
    return ((n + m - 1) // m) * m


def decoder_kernel(x_ref, w1_ref, b1_ref, w2_ref, b2_ref, o_ref):
    # fc1 + tanh (dropout == identity in eval mode)
    h = jnp.dot(x_ref[...], w1_ref[...], preferred_element_type=jnp.float32)
    h = jnp.tanh(h + b1_ref[...])
    # fc2 + tanh  (padded columns: w2/b2 are zero there -> tanh(0) = 0, sliced off later)
    y = jnp.dot(h, w2_ref[...], preferred_element_type=jnp.float32)
    o_ref[...] = jnp.tanh(y + b2_ref[...]).astype(o_ref.dtype)


def decoder_forward(x, w1, b1, w2, b2, *, tile_b=256):
    """x: (B, latent) f32 -> (B, 28, 28) f32."""
    B, latent = x.shape
    hidden = w1.shape[1]            # 128
    out_raw = w2.shape[1]           # 784
    out_pad = _round_up(out_raw, 128)   # 896 = 7*128 (lane-dense stores)

    # Zero-pad fc2 columns to a multiple of 128 lanes.
    w2p = jnp.pad(w2, ((0, 0), (0, out_pad - out_raw)))
    b2p = jnp.pad(b2.reshape(1, out_raw), ((0, 0), (0, out_pad - out_raw)))
    b1p = b1.reshape(1, hidden)

    # Batch tiling: biggest of (tile_b, padded B) that keeps 8-row alignment.
    tb = min(tile_b, _round_up(B, 8))
    B_pad = _round_up(B, tb)
    xp = jnp.pad(x, ((0, B_pad - B), (0, 0))) if B_pad != B else x

    grid = (B_pad // tb,)

    flops = 2 * B_pad * (latent * hidden + hidden * out_pad)
    transcendentals = B_pad * (hidden + out_pad)
    bytes_accessed = 4 * (B_pad * latent + latent * hidden + hidden
                          + hidden * out_pad + out_pad + B_pad * out_pad)

    out = pl.pallas_call(
        decoder_kernel,
        out_shape=jax.ShapeDtypeStruct((B_pad, out_pad), jnp.float32),
        grid=grid,
        in_specs=[
            # batch-tiled activations
            pl.BlockSpec((tb, latent), lambda i: (i, 0)),
            # weights / biases: constant index_map -> stay resident in VMEM
            pl.BlockSpec((latent, hidden), lambda i: (0, 0)),
            pl.BlockSpec((1, hidden), lambda i: (0, 0)),
            pl.BlockSpec((hidden, out_pad), lambda i: (0, 0)),
            pl.BlockSpec((1, out_pad), lambda i: (0, 0)),
        ],
        out_specs=pl.BlockSpec((tb, out_pad), lambda i: (i, 0)),
        compiler_params=pltpu.CompilerParams(
            dimension_semantics=("parallel",)),
        cost_estimate=pl.CostEstimate(
            flops=flops,
            transcendentals=transcendentals,
            bytes_accessed=bytes_accessed),
    )(xp, w1, b1p, w2p, b2p)

    # Slice off batch/lane padding, then match torch's view(-1, 28, 28).
    # (Consumers that can work on the (B, 784) slab should use `out` directly;
    #  the (B,28,28) relayout is lane-sparse and done here only to match spec.)
    out = out[:B, :out_raw]
    return out.reshape(-1, 28, 28)


def init_params(key, latent_size):
    """Deterministic init mirroring nn.Linear's U(-1/sqrt(fan_in), 1/sqrt(fan_in))."""
    k1, k2, k3, k4 = jax.random.split(key, 4)
    hidden, out_dim = 128, 28 * 28

    bound1 = 1.0 / jnp.sqrt(latent_size)
    w1 = jax.random.uniform(k1, (latent_size, hidden), jnp.float32,
                            minval=-bound1, maxval=bound1)
    b1 = jax.random.uniform(k2, (hidden,), jnp.float32,
                            minval=-bound1, maxval=bound1)

    bound2 = 1.0 / jnp.sqrt(hidden)
    w2 = jax.random.uniform(k3, (hidden, out_dim), jnp.float32,
                            minval=-bound2, maxval=bound2)
    b2 = jax.random.uniform(k4, (out_dim,), jnp.float32,
                            minval=-bound2, maxval=bound2)
    return w1, b1, w2, b2


if __name__ == "__main__":
    key = jax.random.PRNGKey(0)
    k_param, k_x, k_x2 = jax.random.split(key, 3)

    batch, latent_size = 8, 32
    w1, b1, w2, b2 = init_params(k_param, latent_size)

    # Small-batch check (single grid step).
    x = jax.random.normal(k_x, (batch, latent_size), jnp.float32)
    out = decoder_forward(x, w1, b1, w2, b2)
    out = jax.block_until_ready(out)
    assert out.shape == (batch, 28, 28), out.shape
    ref = jnp.tanh(jnp.tanh(x @ w1 + b1) @ w2 + b2).reshape(-1, 28, 28)
    assert jnp.allclose(out, ref, atol=1e-5, rtol=1e-5)

    # Larger / non-divisible batch check (exercises batch padding + grid > 1).
    batch2 = 300
    x2 = jax.random.normal(k_x2, (batch2, latent_size), jnp.float32)
    out2 = decoder_forward(x2, w1, b1, w2, b2, tile_b=128)
    out2 = jax.block_until_ready(out2)
    assert out2.shape == (batch2, 28, 28), out2.shape
    ref2 = jnp.tanh(jnp.tanh(x2 @ w1 + b1) @ w2 + b2).reshape(-1, 28, 28)
    assert jnp.allclose(out2, ref2, atol=1e-5, rtol=1e-5)

    print("KERNEL_OK")
</pallas_src>

<mosaic_0001>
module attributes {stable_mosaic.version = 11 : i64} {
  func.func @decoder_kernel(%arg0: i32, %arg1: memref<8x32xf32, #tpu.memory_space<vmem>>, %arg2: memref<32x128xf32, #tpu.memory_space<vmem>>, %arg3: memref<1x128xf32, #tpu.memory_space<vmem>>, %arg4: memref<128x896xf32, #tpu.memory_space<vmem>>, %arg5: memref<1x896xf32, #tpu.memory_space<vmem>>, %arg6: memref<8x896xf32, #tpu.memory_space<vmem>>) attributes {dimension_semantics = [#tpu.dimension_semantics<parallel>], iteration_bounds = array<i64: 1>, scalar_prefetch = 0 : i64, scratch_operands = 0 : i64, tpu.core_type = #tpu.core_type<tc>, window_params = [{transform_indices = @transform_0, window_bounds = array<i64: 8, 32>}, {pipeline_mode = #tpu.pipeline_mode<synchronous>, transform_indices = @transform_1, window_bounds = array<i64: 32, 128>}, {pipeline_mode = #tpu.pipeline_mode<synchronous>, transform_indices = @transform_2, window_bounds = array<i64: 1, 128>}, {pipeline_mode = #tpu.pipeline_mode<synchronous>, transform_indices = @transform_3, window_bounds = array<i64: 128, 896>}, {pipeline_mode = #tpu.pipeline_mode<synchronous>, transform_indices = @transform_4, window_bounds = array<i64: 1, 896>}, {transform_indices = @transform_5, window_bounds = array<i64: 8, 896>}]} {
    %c0 = arith.constant 0 : index
    %c0_0 = arith.constant 0 : index
    %0 = vector.load %arg1[%c0, %c0_0] : memref<8x32xf32, #tpu.memory_space<vmem>>, vector<8x32xf32>
    %c0_1 = arith.constant 0 : index
    %c0_2 = arith.constant 0 : index
    %1 = vector.load %arg2[%c0_1, %c0_2] : memref<32x128xf32, #tpu.memory_space<vmem>>, vector<32x128xf32>
    %cst = arith.constant dense<0.000000e+00> : vector<8x128xf32>
    %2 = tpu.matmul %0, %1, %cst {dimension_numbers = #tpu.dot_dimension_numbers<[1], [0], [0], [1], [0, 0, 1, 1], [], []>} : vector<8x32xf32>, vector<32x128xf32>, vector<8x128xf32> -> vector<8x128xf32>
    %c0_3 = arith.constant 0 : index
    %c0_4 = arith.constant 0 : index
    %3 = vector.load %arg3[%c0_3, %c0_4] : memref<1x128xf32, #tpu.memory_space<vmem>>, vector<1x128xf32>
    %4 = vector.broadcast %3 : vector<1x128xf32> to vector<8x128xf32>
    %5 = arith.addf %2, %4 : vector<8x128xf32>
    %6 = math.tanh %5 : vector<8x128xf32>
    %c0_5 = arith.constant 0 : index
    %c0_6 = arith.constant 0 : index
    %7 = vector.load %arg4[%c0_5, %c0_6] : memref<128x896xf32, #tpu.memory_space<vmem>>, vector<128x896xf32>
    %cst_7 = arith.constant dense<0.000000e+00> : vector<8x896xf32>
    %8 = tpu.matmul %6, %7, %cst_7 {dimension_numbers = #tpu.dot_dimension_numbers<[1], [0], [0], [1], [0, 0, 1, 1], [], []>} : vector<8x128xf32>, vector<128x896xf32>, vector<8x896xf32> -> vector<8x896xf32>
    %c0_8 = arith.constant 0 : index
    %c0_9 = arith.constant 0 : index
    %9 = vector.load %arg5[%c0_8, %c0_9] : memref<1x896xf32, #tpu.memory_space<vmem>>, vector<1x896xf32>
    %10 = vector.broadcast %9 : vector<1x896xf32> to vector<8x896xf32>
    %11 = arith.addf %8, %10 : vector<8x896xf32>
    %12 = math.tanh %11 : vector<8x896xf32>
    %c0_10 = arith.constant 0 : index
    %c0_11 = arith.constant 0 : index
    %13 = vector.load %arg6[%c0_10, %c0_11] : memref<8x896xf32, #tpu.memory_space<vmem>>, vector<8x896xf32>
    tpu.vector_store %arg6[%c0_10, %c0_11], %12 {strides = array<i32>} : memref<8x896xf32, #tpu.memory_space<vmem>>, vector<8x896xf32>,
    return
  }
  func.func @transform_0(%arg0: i32) -> (i32, i32) {
    %c0_i32 = arith.constant 0 : i32
    %c0_i32_0 = arith.constant 0 : i32
    return %arg0, %c0_i32 : i32, i32
  }
  func.func @transform_1(%arg0: i32) -> (i32, i32) {
    %c0_i32 = arith.constant 0 : i32
    %c0_i32_0 = arith.constant 0 : i32
    %c0_i32_1 = arith.constant 0 : i32
    return %c0_i32, %c0_i32_0 : i32, i32
  }
  func.func @transform_2(%arg0: i32) -> (i32, i32) {
    %c0_i32 = arith.constant 0 : i32
    %c0_i32_0 = arith.constant 0 : i32
    %c0_i32_1 = arith.constant 0 : i32
    return %c0_i32, %c0_i32_0 : i32, i32
  }
  func.func @transform_3(%arg0: i32) -> (i32, i32) {
    %c0_i32 = arith.constant 0 : i32
    %c0_i32_0 = arith.constant 0 : i32
    %c0_i32_1 = arith.constant 0 : i32
    return %c0_i32, %c0_i32_0 : i32, i32
  }
  func.func @transform_4(%arg0: i32) -> (i32, i32) {
    %c0_i32 = arith.constant 0 : i32
    %c0_i32_0 = arith.constant 0 : i32
    %c0_i32_1 = arith.constant 0 : i32
    return %c0_i32, %c0_i32_0 : i32, i32
  }
  func.func @transform_5(%arg0: i32) -> (i32, i32) {
    %c0_i32 = arith.constant 0 : i32
    %c0_i32_0 = arith.constant 0 : i32
    return %arg0, %c0_i32 : i32, i32
  }
}

</mosaic_0001>

<llo_original>
// kernel: tpu_custom_call.1
$region0: #{tpu_custom_call.1}
  #allocation0 [shape = 'u32[]', space=smem, size = 0x4, offset = 0x4, fixed_abs, tag = 'smem constant byte address 0x4 - core index']
  #allocation1 [shape = 'u32[144,128]{1,0:T(1,128)}', space=vmem, size = 0x12000, scoped, tag = 'internal scratch']
  %s0 = inlined_call_operand.hbm [shape: f32[8,32], index: 0, kind: input, shape index: {}]
  %s1 = inlined_call_operand.hbm [shape: f32[32,128], index: 1, kind: input, shape index: {}]
  %s2 = inlined_call_operand.vmem [shape: f32[1,128], index: 2, kind: input, shape index: {}]
  %s3 = inlined_call_operand.hbm [shape: f32[128,896], index: 3, kind: input, shape index: {}]
  %s4 = inlined_call_operand.vmem [shape: f32[1,896], index: 4, kind: input, shape index: {}]
  %s5 = inlined_call_operand.hbm [shape: f32[8,896], index: 5, kind: output, shape index: {}]
  %s6 = sld [smem:[#allocation0]]
  $region42: #{tpu_custom_call.1} parent=0
    _
  %s8 = ssub.s32 1, %s6
  %s9 = scalar_select 0, %s8, %s6
  $region1: #{tpu_custom_call.1} parent=0
    #allocation2 [shape = 'u8[4096]{0}', space=vmem, size = 0x1000, scoped, tag = 'input window, operand 0, single buffered']
    #allocation3 [shape = 's32[1]{0}', space=sflag, size = 0x4, scoped, tag = 'scoped memory for tpu_custom_call.1']
    #allocation4 [shape = 's32[1]{0}', space=sflag, size = 0x4, scoped, tag = 'scoped memory for tpu_custom_call.1']
    #allocation5 [shape = 'u8[16384]{0}', space=vmem, size = 0x4000, scoped, tag = 'input window, operand 1, single buffered']
    #allocation6 [shape = 's32[1]{0}', space=sflag, size = 0x4, scoped, tag = 'scoped memory for tpu_custom_call.1']
    #allocation7 [shape = 'u8[458752]{0}', space=vmem, size = 0x70000, scoped, tag = 'input window, operand 3, single buffered']
    #allocation8 [shape = 'u8[28672]{0}', space=vmem, size = 0x7000, scoped, tag = 'output window, operand 0, single buffered']
    %10 = vsyncpa [#allocation3], 0
    %11 = vsyncpa [#allocation6], 0
    %12 = vsyncpa [#allocation4], 0
    // Predicated region
    $region2: #{tpu_custom_call.1} parent=1 // pred_check
      _
    $region3: #{tpu_custom_call.1} parent=1 // pred_check_branch
      %14 = sbr.rel (0) target = $region5
    $region4: #{tpu_custom_call.1} parent=1 // pred_region
      %s16 = ssub.s32 128, 128
      %17 = vsyncadd [#allocation3], %s16
      %s19 = sshll.u32 [#allocation2], 4
      %s20 = int_to_ptr.vmem [resolvable:$true] %s19
      %22 = dma.hbm_to_vmem [thread:$0]  %s0, 128, %s20, [#allocation3]
    $region5: #{tpu_custom_call.1} parent=1 // pred_fallthru
      _
    // Predicated region
    $region6: #{tpu_custom_call.1} parent=1 // pred_check
      _
    $region7: #{tpu_custom_call.1} parent=1 // pred_check_branch
      %24 = sbr.rel (0) target = $region9
    $region8: #{tpu_custom_call.1} parent=1 // pred_region
      %s26 = ssub.s32 512, 512
      %27 = vsyncadd [#allocation6], %s26
      %s28 = sshll.u32 [#allocation5], 4
      %s29 = int_to_ptr.vmem [resolvable:$true] %s28
      %34 = dma.hbm_to_vmem [thread:$0]  %s1, 512, %s29, [#allocation6], 128, 128, 8
    $region9: #{tpu_custom_call.1} parent=1 // pred_fallthru
      _
    // Predicated region
    $region10: #{tpu_custom_call.1} parent=1 // pred_check
      _
    $region11: #{tpu_custom_call.1} parent=1 // pred_check_branch
      %36 = sbr.rel (0) target = $region13
    $region12: #{tpu_custom_call.1} parent=1 // pred_region
      _
    $region13: #{tpu_custom_call.1} parent=1 // pred_fallthru
      _
    // Predicated region
    $region14: #{tpu_custom_call.1} parent=1 // pred_check
      _
    $region15: #{tpu_custom_call.1} parent=1 // pred_check_branch
      %38 = sbr.rel (0) target = $region17
    $region16: #{tpu_custom_call.1} parent=1 // pred_region
      %s40 = ssub.s32 14336, 14336
      %41 = vsyncadd [#allocation6], %s40
      %s42 = sshll.u32 [#allocation7], 4
      %s43 = int_to_ptr.vmem [resolvable:$true] %s42
      %48 = dma.hbm_to_vmem [thread:$0]  %s3, 14336, %s43, [#allocation6], 896, 896, 56
    $region17: #{tpu_custom_call.1} parent=1 // pred_fallthru
      _
    // Predicated region
    $region18: #{tpu_custom_call.1} parent=1 // pred_check
      _
    $region19: #{tpu_custom_call.1} parent=1 // pred_check_branch
      %50 = sbr.rel (0) target = $region21
    $region20: #{tpu_custom_call.1} parent=1 // pred_region
      _
    $region21: #{tpu_custom_call.1} parent=1 // pred_fallthru
      _
    // Predicated region
    $region22: #{tpu_custom_call.1} parent=1 // pred_check
      _
    $region23: #{tpu_custom_call.1} parent=1 // pred_check_branch
      %52 = sbr.rel (0) target = $region25
    $region24: #{tpu_custom_call.1} parent=1 // pred_region
      %53 = dma.done [#allocation3], 128
    $region25: #{tpu_custom_call.1} parent=1 // pred_fallthru
      _
    // Predicated region
    $region26: #{tpu_custom_call.1} parent=1 // pred_check
      _
    $region27: #{tpu_custom_call.1} parent=1 // pred_check_branch
      %55 = sbr.rel (0) target = $region29
    $region28: #{tpu_custom_call.1} parent=1 // pred_region
      %56 = dma.done [#allocation6], 512
    $region29: #{tpu_custom_call.1} parent=1 // pred_fallthru
      _
    // Predicated region
    $region30: #{tpu_custom_call.1} parent=1 // pred_check
      _
    $region31: #{tpu_custom_call.1} parent=1 // pred_check_branch
      %58 = sbr.rel (0) target = $region33
    $region32: #{tpu_custom_call.1} parent=1 // pred_region
      %59 = dma.done [#allocation6], 14336
    $region33: #{tpu_custom_call.1} parent=1 // pred_fallthru
      _
    %v60 = vld [vmem:[#allocation2] sm:$0xff]
    %v61 = vld [vmem:[#allocation5] sm:$0xff]
    %v62 = vld [vmem:[#allocation5 + $0x8] sm:$0xff]
    %v63 = vld [vmem:[#allocation5 + $0x10] sm:$0xff]
    %v64 = vld [vmem:[#allocation5 + $0x18] sm:$0xff]
    %v65 = vld [vmem:[%s2] sm:$0x1]
    %v67 = vlaneseq
    %v68 = vshrl.u32 %v67, 7
    %v69 = vsub.s32 0, %v68
    %v70 = vrot.slane %v65, %v69
    %vm72 = vcmask 261120
    %v74 = vsel %vm72, %v60, 0
    %76 = vmatprep.subr.mxu0 0.0
    %77 = vmatpush1.msra.mxu0 %v61
    %78 = vmatprep.subr.mxu0 0.0
    %79 = vmatpush1.msra.mxu0 %v62
    %80 = vmatprep.subr.mxu0 0.0
    %81 = vmatpush1.msra.mxu0 %v63
    %82 = vmatprep.subr.mxu0 0.0
    %83 = vmatpush1.msra.mxu0 %v64
    %84 = vmatprep.subr.mxu0 0.0
    %85 = vmatpush1.msra.mxu0 0.0
    %86 = vmatprep.subr.mxu0 0.0
    %87 = vmatpush1.msra.mxu0 0.0
    %88 = vmatprep.subr.mxu0 0.0
    %89 = vmatpush1.msra.mxu0 0.0
    %90 = vmatprep.subr.mxu0 0.0
    %91 = vmatpush1.msra.mxu0 0.0
    %92 = vmatprep.subr.mxu0 0.0
    %93 = vmatpush1.msra.mxu0 0.0
    %94 = vmatprep.subr.mxu0 0.0
    %95 = vmatpush1.msra.mxu0 0.0
    %96 = vmatprep.subr.mxu0 0.0
    %97 = vmatpush1.msra.mxu0 0.0
    %98 = vmatprep.subr.mxu0 0.0
    %99 = vmatpush1.msra.mxu0 0.0
    %100 = vmatprep.subr.mxu0 0.0
    %101 = vmatpush1.msra.mxu0 0.0
    %102 = vmatprep.subr.mxu0 0.0
    %103 = vmatpush1.msra.mxu0 0.0
    %104 = vmatprep.subr.mxu0 0.0
    %105 = vmatpush1.msra.mxu0 0.0
    %106 = vmatprep.subr.mxu0 0.0
    %107 = vmatpush1.msra.mxu0 0.0
    %108 = vmatprep.subr.mxu0 0.0
    %109 = vmatpush1.msra.mxu0 0.0
    %110 = vmatprep.subr.mxu0 0.0
    %111 = vmatpush1.msra.mxu0 0.0
    %112 = vmatprep.subr.mxu0 0.0
    %113 = vmatpush1.msra.mxu0 0.0
    %114 = vmatprep.subr.mxu0 0.0
    %115 = vmatpush1.msra.mxu0 0.0
    %116 = vmatprep.subr.mxu0 0.0
    %117 = vmatpush1.msra.mxu0 0.0
    %118 = vmatprep.subr.mxu0 0.0
    %119 = vmatpush1.msra.mxu0 0.0
    %120 = vmatprep.subr.mxu0 0.0
    %121 = vmatpush1.msra.mxu0 0.0
    %122 = vmatprep.subr.mxu0 0.0
    %123 = vmatpush1.msra.mxu0 0.0
    %124 = vmatprep.subr.mxu0 0.0
    %125 = vmatpush1.msra.mxu0 0.0
    %126 = vmatprep.subr.mxu0 0.0
    %127 = vmatpush1.msra.mxu0 0.0
    %128 = vmatprep.subr.mxu0 0.0
    %129 = vmatpush1.msra.mxu0 0.0
    %130 = vmatprep.subr.mxu0 0.0
    %131 = vmatpush1.msra.mxu0 0.0
    %132 = vmatprep.subr.mxu0 0.0
    %133 = vmatpush1.msra.mxu0 0.0
    %134 = vmatprep.subr.mxu0 0.0
    %135 = vmatpush1.msra.mxu0 0.0
    %136 = vmatprep.subr.mxu0 0.0
    %137 = vmatpush1.msra.mxu0 0.0
    %138 = vmatprep.subr.mxu0 0.0
    %139 = vmatpush1.msra.mxu0 0.0
    %140 = vmatprep.mubr.f32.mxu0 0.0
    %141 = vmatmul.mubr.f32.gmra.mrb[0].mxu0 %v74
    %v142 = vpop.f32.mrb[0].mxu0
    %v143 = vadd.f32 %v70, %v142
    %v144 = vpop.f32.mrb[0].mxu0
    %145 = vdwg.mxu0
    %v146 = vtanh.pop %v143
    %v147 = vld [vmem:[#allocation7] sm:$0xff]
    %v148 = vld [vmem:[#allocation7 + $0x8] sm:$0xff]
    %v149 = vld [vmem:[#allocation7 + $0x10] sm:$0xff]
    %v150 = vld [vmem:[#allocation7 + $0x18] sm:$0xff]
    %v151 = vld [vmem:[#allocation7 + $0x20] sm:$0xff]
    %v152 = vld [vmem:[#allocation7 + $0x28] sm:$0xff]
    %v153 = vld [vmem:[#allocation7 + $0x30] sm:$0xff]
    %v154 = vld [vmem:[#allocation7 + $0x38] sm:$0xff]
    %v155 = vld [vmem:[#allocation7 + $0x40] sm:$0xff]
    %v156 = vld [vmem:[#allocation7 + $0x48] sm:$0xff]
    %v157 = vld [vmem:[#allocation7 + $0x50] sm:$0xff]
    %v158 = vld [vmem:[#allocation7 + $0x58] sm:$0xff]
    %v159 = vld [vmem:[#allocation7 + $0x60] sm:$0xff]
    %v160 = vld [vmem:[#allocation7 + $0x68] sm:$0xff]
    %v161 = vld [vmem:[#allocation7 + $0x70] sm:$0xff]
    %v162 = vld [vmem:[#allocation7 + $0x78] sm:$0xff]
    %v163 = vld [vmem:[#allocation7 + $0x80] sm:$0xff]
    %v164 = vld [vmem:[#allocation7 + $0x88] sm:$0xff]
    %v165 = vld [vmem:[#allocation7 + $0x90] sm:$0xff]
    %v166 = vld [vmem:[#allocation7 + $0x98] sm:$0xff]
    %v167 = vld [vmem:[#allocation7 + $0xa0] sm:$0xff]
    %v168 = vld [vmem:[#allocation7 + $0xa8] sm:$0xff]
    %v169 = vld [vmem:[#allocation7 + $0xb0] sm:$0xff]
    %v170 = vld [vmem:[#allocation7 + $0xb8] sm:$0xff]
    %v171 = vld [vmem:[#allocation7 + $0xc0] sm:$0xff]
    %v172 = vld [vmem:[#allocation7 + $0xc8] sm:$0xff]
    %v173 = vld [vmem:[#allocation7 + $0xd0] sm:$0xff]
    %v174 = vld [vmem:[#allocation7 + $0xd8] sm:$0xff]
    %v175 = vld [vmem:[#allocation7 + $0xe0] sm:$0xff]
    %v176 = vld [vmem:[#allocation7 + $0xe8] sm:$0xff]
    %v177 = vld [vmem:[#allocation7 + $0xf0] sm:$0xff]
    %v178 = vld [vmem:[#allocation7 + $0xf8] sm:$0xff]
    %v179 = vld [vmem:[#allocation7 + $0x100] sm:$0xff]
    %v180 = vld [vmem:[#allocation7 + $0x108] sm:$0xff]
    %v181 = vld [vmem:[#allocation7 + $0x110] sm:$0xff]
    %v182 = vld [vmem:[#allocation7 + $0x118] sm:$0xff]
    %v183 = vld [vmem:[#allocation7 + $0x120] sm:$0xff]
    %v184 = vld [vmem:[#allocation7 + $0x128] sm:$0xff]
    %v185 = vld [vmem:[#allocation7 + $0x130] sm:$0xff]
    %v186 = vld [vmem:[#allocation7 + $0x138] sm:$0xff]
    %v187 = vld [vmem:[#allocation7 + $0x140] sm:$0xff]
    %v188 = vld [vmem:[#allocation7 + $0x148] sm:$0xff]
    %v189 = vld [vmem:[#allocation7 + $0x150] sm:$0xff]
    %v190 = vld [vmem:[#allocation7 + $0x158] sm:$0xff]
    %v191 = vld [vmem:[#allocation7 + $0x160] sm:$0xff]
    %v192 = vld [vmem:[#allocation7 + $0x168] sm:$0xff]
    %v193 = vld [vmem:[#allocation7 + $0x170] sm:$0xff]
    %v194 = vld [vmem:[#allocation7 + $0x178] sm:$0xff]
    %v195 = vld [vmem:[#allocation7 + $0x180] sm:$0xff]
    %v196 = vld [vmem:[#allocation7 + $0x188] sm:$0xff]
    %v197 = vld [vmem:[#allocation7 + $0x190] sm:$0xff]
    %v198 = vld [vmem:[#allocation7 + $0x198] sm:$0xff]
    %v199 = vld [vmem:[#allocation7 + $0x1a0] sm:$0xff]
    %v200 = vld [vmem:[#allocation7 + $0x1a8] sm:$0xff]
    %v201 = vld [vmem:[#allocation7 + $0x1b0] sm:$0xff]
    %v202 = vld [vmem:[#allocation7 + $0x1b8] sm:$0xff]
    %v203 = vld [vmem:[#allocation7 + $0x1c0] sm:$0xff]
    %v204 = vld [vmem:[#allocation7 + $0x1c8] sm:$0xff]
    %v205 = vld [vmem:[#allocation7 + $0x1d0] sm:$0xff]
    %v206 = vld [vmem:[#allocation7 + $0x1d8] sm:$0xff]
    %v207 = vld [vmem:[#allocation7 + $0x1e0] sm:$0xff]
    %v208 = vld [vmem:[#allocation7 + $0x1e8] sm:$0xff]
    %v209 = vld [vmem:[#allocation7 + $0x1f0] sm:$0xff]
    %v210 = vld [vmem:[#allocation7 + $0x1f8] sm:$0xff]
    %v211 = vld [vmem:[#allocation7 + $0x200] sm:$0xff]
    %v212 = vld [vmem:[#allocation7 + $0x208] sm:$0xff]
    %v213 = vld [vmem:[#allocation7 + $0x210] sm:$0xff]
    %v214 = vld [vmem:[#allocation7 + $0x218] sm:$0xff]
    %v215 = vld [vmem:[#allocation7 + $0x220] sm:$0xff]
    %v216 = vld [vmem:[#allocation7 + $0x228] sm:$0xff]
    %v217 = vld [vmem:[#allocation7 + $0x230] sm:$0xff]
    %v218 = vld [vmem:[#allocation7 + $0x238] sm:$0xff]
    %v219 = vld [vmem:[#allocation7 + $0x240] sm:$0xff]
    %v220 = vld [vmem:[#allocation7 + $0x248] sm:$0xff]
    %v221 = vld [vmem:[#allocation7 + $0x250] sm:$0xff]
    %v222 = vld [vmem:[#allocation7 + $0x258] sm:$0xff]
    %v223 = vld [vmem:[#allocation7 + $0x260] sm:$0xff]
    %v224 = vld [vmem:[#allocation7 + $0x268] sm:$0xff]
    %v225 = vld [vmem:[#allocation7 + $0x270] sm:$0xff]
    %v226 = vld [vmem:[#allocation7 + $0x278] sm:$0xff]
    %v227 = vld [vmem:[#allocation7 + $0x280] sm:$0xff]
    %v228 = vld [vmem:[#allocation7 + $0x288] sm:$0xff]
    %v229 = vld [vmem:[#allocation7 + $0x290] sm:$0xff]
    %v230 = vld [vmem:[#allocation7 + $0x298] sm:$0xff]
    %v231 = vld [vmem:[#allocation7 + $0x2a0] sm:$0xff]
    %v232 = vld [vmem:[#allocation7 + $0x2a8] sm:$0xff]
    %v233 = vld [vmem:[#allocation7 + $0x2b0] sm:$0xff]
    %v234 = vld [vmem:[#allocation7 + $0x2b8] sm:$0xff]
    %v235 = vld [vmem:[#allocation7 + $0x2c0] sm:$0xff]
    %v236 = vld [vmem:[#allocation7 + $0x2c8] sm:$0xff]
    %v237 = vld [vmem:[#allocation7 + $0x2d0] sm:$0xff]
    %v238 = vld [vmem:[#allocation7 + $0x2d8] sm:$0xff]
    %v239 = vld [vmem:[#allocation7 + $0x2e0] sm:$0xff]
    %v240 = vld [vmem:[#allocation7 + $0x2e8] sm:$0xff]
    %v241 = vld [vmem:[#allocation7 + $0x2f0] sm:$0xff]
    %v242 = vld [vmem:[#allocation7 + $0x2f8] sm:$0xff]
    %v243 = vld [vmem:[#allocation7 + $0x300] sm:$0xff]
    %v244 = vld [vmem:[#allocation7 + $0x308] sm:$0xff]
    %v245 = vld [vmem:[#allocation7 + $0x310] sm:$0xff]
    %v246 = vld [vmem:[#allocation7 + $0x318] sm:$0xff]
    %v247 = vld [vmem:[#allocation7 + $0x320] sm:$0xff]
    %v248 = vld [vmem:[#allocation7 + $0x328] sm:$0xff]
    %v249 = vld [vmem:[#allocation7 + $0x330] sm:$0xff]
    %v250 = vld [vmem:[#allocation7 + $0x338] sm:$0xff]
    %v251 = vld [vmem:[#allocation7 + $0x340] sm:$0xff]
    %v252 = vld [vmem:[#allocation7 + $0x348] sm:$0xff]
    %v253 = vld [vmem:[#allocation7 + $0x350] sm:$0xff]
    %v254 = vld [vmem:[#allocation7 + $0x358] sm:$0xff]
    %v255 = vld [vmem:[#allocation7 + $0x360] sm:$0xff]
    %v256 = vld [vmem:[#allocation7 + $0x368] sm:$0xff]
    %v257 = vld [vmem:[#allocation7 + $0x370] sm:$0xff]
    %v258 = vld [vmem:[#allocation7 + $0x378] sm:$0xff]
    %v259 = vld [vmem:[%s4] sm:$0xff]
    %v261 = vlaneseq
    %v262 = vshrl.u32 %v261, 7
    %v263 = vsub.s32 0, %v262
    %v264 = vrot.slane %v259, %v263
    %v265 = vlaneseq
    %v266 = vshrl.u32 %v265, 7
    %v267 = vsub.s32 1, %v266
    %v268 = vrot.slane %v259, %v267
    %v269 = vlaneseq
    %v270 = vshrl.u32 %v269, 7
    %v271 = vsub.s32 2, %v270
    %v272 = vrot.slane %v259, %v271
    %v273 = vlaneseq
    %v274 = vshrl.u32 %v273, 7
    %v275 = vsub.s32 3, %v274
    %v276 = vrot.slane %v259, %v275
    %v277 = vlaneseq
    %v278 = vshrl.u32 %v277, 7
    %v279 = vsub.s32 4, %v278
    %v280 = vrot.slane %v259, %v279
    %v281 = vlaneseq
    %v282 = vshrl.u32 %v281, 7
    %v283 = vsub.s32 5, %v282
    %v284 = vrot.slane %v259, %v283
    %v285 = vlaneseq
    %v286 = vshrl.u32 %v285, 7
    %v287 = vsub.s32 6, %v286
    %v288 = vrot.slane %v259, %v287
    %296 = vmatprep.subr.mxu0 %v148
    %297 = vmatpush1.msra.mxu0 %v147
    %298 = vmatprep.subr.mxu0 %v155
    %299 = vmatpush1.msra.mxu0 %v154
    %300 = vmatprep.subr.mxu0 %v162
    %301 = vmatpush1.msra.mxu0 %v161
    %302 = vmatprep.subr.mxu0 %v169
    %303 = vmatpush1.msra.mxu0 %v168
    %304 = vmatprep.subr.mxu0 %v176
    %305 = vmatpush1.msra.mxu0 %v175
    %306 = vmatprep.subr.mxu0 %v183
    %307 = vmatpush1.msra.mxu0 %v182
    %308 = vmatprep.subr.mxu0 %v190
    %309 = vmatpush1.msra.mxu0 %v189
    %310 = vmatprep.subr.mxu0 %v197
    %311 = vmatpush1.msra.mxu0 %v196
    %312 = vmatprep.subr.mxu0 %v204
    %313 = vmatpush1.msra.mxu0 %v203
    %314 = vmatprep.subr.mxu0 %v211
    %315 = vmatpush1.msra.mxu0 %v210
    %316 = vmatprep.subr.mxu0 %v218
    %317 = vmatpush1.msra.mxu0 %v217
    %318 = vmatprep.subr.mxu0 %v225
    %319 = vmatpush1.msra.mxu0 %v224
    %320 = vmatprep.subr.mxu0 %v232
    %321 = vmatpush1.msra.mxu0 %v231
    %322 = vmatprep.subr.mxu0 %v239
    %323 = vmatpush1.msra.mxu0 %v238
    %324 = vmatprep.subr.mxu0 %v246
    %325 = vmatpush1.msra.mxu0 %v245
    %326 = vmatprep.subr.mxu0 %v253
    %327 = vmatpush1.msra.mxu0 %v252
    %328 = vmatprep.subr.mxu0 0.0
    %329 = vmatpush1.msra.mxu0 0.0
    %330 = vmatprep.subr.mxu0 0.0
    %331 = vmatpush1.msra.mxu0 0.0
    %332 = vmatprep.subr.mxu0 0.0
    %333 = vmatpush1.msra.mxu0 0.0
    %334 = vmatprep.subr.mxu0 0.0
    %335 = vmatpush1.msra.mxu0 0.0
    %336 = vmatprep.subr.mxu0 0.0
    %337 = vmatpush1.msra.mxu0 0.0
    %338 = vmatprep.subr.mxu0 0.0
    %339 = vmatpush1.msra.mxu0 0.0
    %340 = vmatprep.subr.mxu0 0.0
    %341 = vmatpush1.msra.mxu0 0.0
    %342 = vmatprep.subr.mxu0 0.0
    %343 = vmatpush1.msra.mxu0 0.0
    %344 = vmatprep.subr.mxu0 0.0
    %345 = vmatpush1.msra.mxu0 0.0
    %346 = vmatprep.subr.mxu0 0.0
    %347 = vmatpush1.msra.mxu0 0.0
    %348 = vmatprep.subr.mxu0 0.0
    %349 = vmatpush1.msra.mxu0 0.0
    %350 = vmatprep.subr.mxu0 0.0
    %351 = vmatpush1.msra.mxu0 0.0
    %352 = vmatprep.subr.mxu0 0.0
    %353 = vmatpush1.msra.mxu0 0.0
    %354 = vmatprep.subr.mxu0 0.0
    %355 = vmatpush1.msra.mxu0 0.0
    %356 = vmatprep.subr.mxu0 0.0
    %357 = vmatpush1.msra.mxu0 0.0
    %358 = vmatprep.subr.mxu0 0.0
    %359 = vmatpush1.msra.mxu0 0.0
    %360 = vmatprep.mubr.f32.mxu0 0.0
    %361 = vmatmul.mubr.f32.gmra.mrb[0].mxu0 %v146
    %v362 = vpop.f32.mrb[0].mxu0
    %v363 = vadd.f32 %v264, %v362
    %v364 = vpop.f32.mrb[0].mxu0
    %v365 = vadd.f32 %v268, %v364
    %366 = vdwg.mxu0
    %367 = vmatprep.subr.mxu0 %v150
    %368 = vmatpush1.msra.mxu0 %v149
    %369 = vmatprep.subr.mxu0 %v157
    %370 = vmatpush1.msra.mxu0 %v156
    %371 = vmatprep.subr.mxu0 %v164
    %372 = vmatpush1.msra.mxu0 %v163
    %373 = vmatprep.subr.mxu0 %v171
    %374 = vmatpush1.msra.mxu0 %v170
    %375 = vmatprep.subr.mxu0 %v178
    %376 = vmatpush1.msra.mxu0 %v177
    %377 = vmatprep.subr.mxu0 %v185
    %378 = vmatpush1.msra.mxu0 %v184
    %379 = vmatprep.subr.mxu0 %v192
    %380 = vmatpush1.msra.mxu0 %v191
    %381 = vmatprep.subr.mxu0 %v199
    %382 = vmatpush1.msra.mxu0 %v198
    %383 = vmatprep.subr.mxu0 %v206
    %384 = vmatpush1.msra.mxu0 %v205
    %385 = vmatprep.subr.mxu0 %v213
    %386 = vmatpush1.msra.mxu0 %v212
    %387 = vmatprep.subr.mxu0 %v220
    %388 = vmatpush1.msra.mxu0 %v219
    %389 = vmatprep.subr.mxu0 %v227
    %390 = vmatpush1.msra.mxu0 %v226
    %391 = vmatprep.subr.mxu0 %v234
    %392 = vmatpush1.msra.mxu0 %v233
    %393 = vmatprep.subr.mxu0 %v241
    %394 = vmatpush1.msra.mxu0 %v240
    %395 = vmatprep.subr.mxu0 %v248
    %396 = vmatpush1.msra.mxu0 %v247
    %397 = vmatprep.subr.mxu0 %v255
    %398 = vmatpush1.msra.mxu0 %v254
    %399 = vmatprep.subr.mxu0 0.0
    %400 = vmatpush1.msra.mxu0 0.0
    %401 = vmatprep.subr.mxu0 0.0
    %402 = vmatpush1.msra.mxu0 0.0
    %403 = vmatprep.subr.mxu0 0.0
    %404 = vmatpush1.msra.mxu0 0.0
    %405 = vmatprep.subr.mxu0 0.0
    %406 = vmatpush1.msra.mxu0 0.0
    %407 = vmatprep.subr.mxu0 0.0
    %408 = vmatpush1.msra.mxu0 0.0
    %409 = vmatprep.subr.mxu0 0.0
    %410 = vmatpush1.msra.mxu0 0.0
    %411 = vmatprep.subr.mxu0 0.0
    %412 = vmatpush1.msra.mxu0 0.0
    %413 = vmatprep.subr.mxu0 0.0
    %414 = vmatpush1.msra.mxu0 0.0
    %415 = vmatprep.subr.mxu0 0.0
    %416 = vmatpush1.msra.mxu0 0.0
    %417 = vmatprep.subr.mxu0 0.0
    %418 = vmatpush1.msra.mxu0 0.0
    %419 = vmatprep.subr.mxu0 0.0
    %420 = vmatpush1.msra.mxu0 0.0
    %421 = vmatprep.subr.mxu0 0.0
    %422 = vmatpush1.msra.mxu0 0.0
    %423 = vmatprep.subr.mxu0 0.0
    %424 = vmatpush1.msra.mxu0 0.0
    %425 = vmatprep.subr.mxu0 0.0
    %426 = vmatpush1.msra.mxu0 0.0
    %427 = vmatprep.subr.mxu0 0.0
    %428 = vmatpush1.msra.mxu0 0.0
    %429 = vmatprep.subr.mxu0 0.0
    %430 = vmatpush1.msra.mxu0 0.0
    %431 = vmatprep.mubr.f32.mxu0 0.0
    %432 = vmatmul.mubr.f32.gmra.mrb[0].mxu0 %v146
    %v433 = vpop.f32.mrb[0].mxu0
    %v434 = vadd.f32 %v272, %v433
    %v435 = vpop.f32.mrb[0].mxu0
    %v436 = vadd.f32 %v276, %v435
    %437 = vdwg.mxu0
    %438 = vmatprep.subr.mxu0 %v152
    %439 = vmatpush1.msra.mxu0 %v151
    %440 = vmatprep.subr.mxu0 %v159
    %441 = vmatpush1.msra.mxu0 %v158
    %442 = vmatprep.subr.mxu0 %v166
    %443 = vmatpush1.msra.mxu0 %v165
    %444 = vmatprep.subr.mxu0 %v173
    %445 = vmatpush1.msra.mxu0 %v172
    %446 = vmatprep.subr.mxu0 %v180
    %447 = vmatpush1.msra.mxu0 %v179
    %448 = vmatprep.subr.mxu0 %v187
    %449 = vmatpush1.msra.mxu0 %v186
    %450 = vmatprep.subr.mxu0 %v194
    %451 = vmatpush1.msra.mxu0 %v193
    %452 = vmatprep.subr.mxu0 %v201
    %453 = vmatpush1.msra.mxu0 %v200
    %454 = vmatprep.subr.mxu0 %v208
    %455 = vmatpush1.msra.mxu0 %v207
    %456 = vmatprep.subr.mxu0 %v215
    %457 = vmatpush1.msra.mxu0 %v214
    %458 = vmatprep.subr.mxu0 %v222
    %459 = vmatpush1.msra.mxu0 %v221
    %460 = vmatprep.subr.mxu0 %v229
    %461 = vmatpush1.msra.mxu0 %v228
    %462 = vmatprep.subr.mxu0 %v236
    %463 = vmatpush1.msra.mxu0 %v235
    %464 = vmatprep.subr.mxu0 %v243
    %465 = vmatpush1.msra.mxu0 %v242
    %466 = vmatprep.subr.mxu0 %v250
    %467 = vmatpush1.msra.mxu0 %v249
    %468 = vmatprep.subr.mxu0 %v257
    %469 = vmatpush1.msra.mxu0 %v256
    %470 = vmatprep.subr.mxu0 0.0
    %471 = vmatpush1.msra.mxu0 0.0
    %472 = vmatprep.subr.mxu0 0.0
    %473 = vmatpush1.msra.mxu0 0.0
    %474 = vmatprep.subr.mxu0 0.0
    %475 = vmatpush1.msra.mxu0 0.0
    %476 = vmatprep.subr.mxu0 0.0
    %477 = vmatpush1.msra.mxu0 0.0
    %478 = vmatprep.subr.mxu0 0.0
    %479 = vmatpush1.msra.mxu0 0.0
    %480 = vmatprep.subr.mxu0 0.0
    %481 = vmatpush1.msra.mxu0 0.0
    %482 = vmatprep.subr.mxu0 0.0
    %483 = vmatpush1.msra.mxu0 0.0
    %484 = vmatprep.subr.mxu0 0.0
    %485 = vmatpush1.msra.mxu0 0.0
    %486 = vmatprep.subr.mxu0 0.0
    %487 = vmatpush1.msra.mxu0 0.0
    %488 = vmatprep.subr.mxu0 0.0
    %489 = vmatpush1.msra.mxu0 0.0
    %490 = vmatprep.subr.mxu0 0.0
    %491 = vmatpush1.msra.mxu0 0.0
    %492 = vmatprep.subr.mxu0 0.0
    %493 = vmatpush1.msra.mxu0 0.0
    %494 = vmatprep.subr.mxu0 0.0
    %495 = vmatpush1.msra.mxu0 0.0
    %496 = vmatprep.subr.mxu0 0.0
    %497 = vmatpush1.msra.mxu0 0.0
    %498 = vmatprep.subr.mxu0 0.0
    %499 = vmatpush1.msra.mxu0 0.0
    %500 = vmatprep.subr.mxu0 0.0
    %501 = vmatpush1.msra.mxu0 0.0
    %502 = vmatprep.mubr.f32.mxu0 0.0
    %503 = vmatmul.mubr.f32.gmra.mrb[0].mxu0 %v146
    %v504 = vpop.f32.mrb[0].mxu0
    %v505 = vadd.f32 %v280, %v504
    %v506 = vpop.f32.mrb[0].mxu0
    %v507 = vadd.f32 %v284, %v506
    %508 = vdwg.mxu0
    %509 = vmatprep.subr.mxu0 0.0
    %510 = vmatpush1.msra.mxu0 %v153
    %511 = vmatprep.subr.mxu0 0.0
    %512 = vmatpush1.msra.mxu0 %v160
    %513 = vmatprep.subr.mxu0 0.0
    %514 = vmatpush1.msra.mxu0 %v167
    %515 = vmatprep.subr.mxu0 0.0
    %516 = vmatpush1.msra.mxu0 %v174
    %517 = vmatprep.subr.mxu0 0.0
    %518 = vmatpush1.msra.mxu0 %v181
    %519 = vmatprep.subr.mxu0 0.0
    %520 = vmatpush1.msra.mxu0 %v188
    %521 = vmatprep.subr.mxu0 0.0
    %522 = vmatpush1.msra.mxu0 %v195
    %523 = vmatprep.subr.mxu0 0.0
    %524 = vmatpush1.msra.mxu0 %v202
    %525 = vmatprep.subr.mxu0 0.0
    %526 = vmatpush1.msra.mxu0 %v209
    %527 = vmatprep.subr.mxu0 0.0
    %528 = vmatpush1.msra.mxu0 %v216
    %529 = vmatprep.subr.mxu0 0.0
    %530 = vmatpush1.msra.mxu0 %v223
    %531 = vmatprep.subr.mxu0 0.0
    %532 = vmatpush1.msra.mxu0 %v230
    %533 = vmatprep.subr.mxu0 0.0
    %534 = vmatpush1.msra.mxu0 %v237
    %535 = vmatprep.subr.mxu0 0.0
    %536 = vmatpush1.msra.mxu0 %v244
    %537 = vmatprep.subr.mxu0 0.0
    %538 = vmatpush1.msra.mxu0 %v251
    %539 = vmatprep.subr.mxu0 0.0
    %540 = vmatpush1.msra.mxu0 %v258
    %541 = vmatprep.subr.mxu0 0.0
    %542 = vmatpush1.msra.mxu0 0.0
    %543 = vmatprep.subr.mxu0 0.0
    %544 = vmatpush1.msra.mxu0 0.0
    %545 = vmatprep.subr.mxu0 0.0
    %546 = vmatpush1.msra.mxu0 0.0
    %547 = vmatprep.subr.mxu0 0.0
    %548 = vmatpush1.msra.mxu0 0.0
    %549 = vmatprep.subr.mxu0 0.0
    %550 = vmatpush1.msra.mxu0 0.0
    %551 = vmatprep.subr.mxu0 0.0
    %552 = vmatpush1.msra.mxu0 0.0
    %553 = vmatprep.subr.mxu0 0.0
    %554 = vmatpush1.msra.mxu0 0.0
    %555 = vmatprep.subr.mxu0 0.0
    %556 = vmatpush1.msra.mxu0 0.0
    %557 = vmatprep.subr.mxu0 0.0
    %558 = vmatpush1.msra.mxu0 0.0
    %559 = vmatprep.subr.mxu0 0.0
    %560 = vmatpush1.msra.mxu0 0.0
    %561 = vmatprep.subr.mxu0 0.0
    %562 = vmatpush1.msra.mxu0 0.0
    %563 = vmatprep.subr.mxu0 0.0
    %564 = vmatpush1.msra.mxu0 0.0
    %565 = vmatprep.subr.mxu0 0.0
    %566 = vmatpush1.msra.mxu0 0.0
    %567 = vmatprep.subr.mxu0 0.0
    %568 = vmatpush1.msra.mxu0 0.0
    %569 = vmatprep.subr.mxu0 0.0
    %570 = vmatpush1.msra.mxu0 0.0
    %571 = vmatprep.subr.mxu0 0.0
    %572 = vmatpush1.msra.mxu0 0.0
    %573 = vmatprep.mubr.f32.mxu0 0.0
    %574 = vmatmul.mubr.f32.gmra.mrb[0].mxu0 %v146
    %v575 = vpop.f32.mrb[0].mxu0
    %v576 = vadd.f32 %v288, %v575
    %v577 = vpop.f32.mrb[0].mxu0
    %578 = vdwg.mxu0
    %v579 = vtanh.pop %v363
    %v580 = vtanh.pop %v365
    %v581 = vtanh.pop %v434
    %v582 = vtanh.pop %v436
    %v583 = vtanh.pop %v505
    %v584 = vtanh.pop %v507
    %v585 = vtanh.pop %v576
    %586 = vst [vmem:[#allocation8] sm:$0xff] %v579
    %587 = vst [vmem:[#allocation8 + $0x8] sm:$0xff] %v580
    %588 = vst [vmem:[#allocation8 + $0x10] sm:$0xff] %v581
    %589 = vst [vmem:[#allocation8 + $0x18] sm:$0xff] %v582
    %590 = vst [vmem:[#allocation8 + $0x20] sm:$0xff] %v583
    %591 = vst [vmem:[#allocation8 + $0x28] sm:$0xff] %v584
    %592 = vst [vmem:[#allocation8 + $0x30] sm:$0xff] %v585
    // Predicated region
    $region34: #{tpu_custom_call.1} parent=1 // pred_check
      _
    $region35: #{tpu_custom_call.1} parent=1 // pred_check_branch
      %594 = sbr.rel (0) target = $region37
    $region36: #{tpu_custom_call.1} parent=1 // pred_region
      %s596 = ssub.s32 896, 896
      %597 = vsyncadd [#allocation4], %s596
      %s599 = sshll.u32 [#allocation8], 4
      %s600 = int_to_ptr.vmem [resolvable:$true] %s599
      %602 = dma.vmem_to_hbm [thread:$0]  %s600, 896, %s5, [#allocation4]
    $region37: #{tpu_custom_call.1} parent=1 // pred_fallthru
      _
    // Predicated region
    $region38: #{tpu_custom_call.1} parent=1 // pred_check
      _
    $region39: #{tpu_custom_call.1} parent=1 // pred_check_branch
      %604 = sbr.rel (0) target = $region41
    $region40: #{tpu_custom_call.1} parent=1 // pred_region
      %605 = dma.done [#allocation4], 896
    $region41: #{tpu_custom_call.1} parent=1 // pred_fallthru
      _
    %606 = vsyncpa [#allocation3], 1
    %607 = vsyncpa [#allocation6], 1
    %608 = vsyncpa [#allocation4], 1

</llo_original>
